<compile_context>
chip_gen: v7x
topology: tpu7x:2x2x1
jax: 0.10.0
libtpu: 0.0.40
codegen_flags: <defaults>
</compile_context>

<pallas_src>
import functools

import jax
import jax.numpy as jnp
from jax.experimental import pallas as pl
from jax.experimental.pallas import tpu as pltpu


def _fused_kernel(*refs, num_cols, aggregation):
    """All columns fused.  Per column: one-hot(idx) @ fused_w1 (bf16 MXU, f32 acc)
    -> +b1 -> ReLU -> @ w2 -> +b2; then aggregate and do one lane-dense store."""
    in_refs, out_ref = refs[:-1], refs[-1]
    outs = []
    for c in range(num_cols):
        idx_ref, w1_ref, b1_ref, w2_ref, b2_ref = in_refs[5 * c: 5 * (c + 1)]
        idx = idx_ref[...]                                   # (TB, 1) int32
        tb = idx.shape[0]
        v = w1_ref.shape[0]
        # One-hot row-select fused with the first Linear: onehot @ fused_w1 == fused_w1[idx].
        # (Out-of-range indices silently yield a zero row; inputs are assumed in-range.)
        onehot = (jax.lax.broadcasted_iota(jnp.int32, (tb, v), 1) == idx).astype(w1_ref.dtype)
        h = jnp.dot(onehot, w1_ref[...], preferred_element_type=jnp.float32) + b1_ref[...]
        h = jnp.maximum(h, 0.0)
        # TODO(synk): Dropout(p=0.2) is the identity in eval mode; training-mode dropout not implemented.
        o = jnp.dot(h.astype(w2_ref.dtype), w2_ref[...],
                    preferred_element_type=jnp.float32) + b2_ref[...]
        outs.append(o)
    if aggregation == "concat":
        res = jnp.concatenate(outs, axis=1)
    elif aggregation == "sum":
        res = functools.reduce(jnp.add, outs)
    elif aggregation == "mean":
        res = functools.reduce(jnp.add, outs) / float(num_cols)
    elif aggregation == "max":
        res = functools.reduce(jnp.maximum, outs)
    else:
        raise ValueError(aggregation)
    out_ref[...] = res.astype(out_ref.dtype)


# ----------------------------- parameters -----------------------------------

def _init_dense_block(key, input_size, hidden_size, output_size):
    k1, k2, k3, k4 = jax.random.split(key, 4)
    return dict(
        w1=jax.random.normal(k1, (input_size, hidden_size), jnp.float32) * 0.1,
        b1=jax.random.normal(k2, (hidden_size,), jnp.float32) * 0.1,
        w2=jax.random.normal(k3, (hidden_size, output_size), jnp.float32) * 0.1,
        b2=jax.random.normal(k4, (output_size,), jnp.float32) * 0.1,
    )


def init_multi_embed_transform(key, sparse_emb_cols, dense_emb_cols, hidden_size, output_size):
    params = {"sparse": [], "dense": []}
    keys = jax.random.split(key, len(sparse_emb_cols) + len(dense_emb_cols))
    ki = 0
    for col in sparse_emb_cols:
        v = col["emb_size"]
        # one-hot embedding == identity weight; never materialized (folded into w1 later).
        params["sparse"].append(_init_dense_block(keys[ki], v, hidden_size, output_size))
        ki += 1
    for col in dense_emb_cols:
        v, d = col["emb_size"], col["emb_dim"]
        ktab, kblk = jax.random.split(keys[ki]); ki += 1
        blk = _init_dense_block(kblk, d, hidden_size, output_size)
        blk["table"] = jax.random.normal(ktab, (v, d), jnp.float32)  # distributional embedding weight
        params["dense"].append(blk)
    return params


def prepare_multi_embed_transform(params, weight_dtype=jnp.bfloat16):
    """Done ONCE at init: fold embedding tables into the first Linear and pre-cast weights."""
    cols = []
    for p in params["sparse"]:
        cols.append(dict(
            w1f=p["w1"].astype(weight_dtype),                       # identity @ w1 == w1
            b1=p["b1"].reshape(1, -1).astype(jnp.float32),
            w2=p["w2"].astype(weight_dtype),
            b2=p["b2"].reshape(1, -1).astype(jnp.float32)))
    for p in params["dense"]:
        w1f = jnp.dot(p["table"], p["w1"], preferred_element_type=jnp.float32)  # [V, hidden]
        cols.append(dict(
            w1f=w1f.astype(weight_dtype),
            b1=p["b1"].reshape(1, -1).astype(jnp.float32),
            w2=p["w2"].astype(weight_dtype),
            b2=p["b2"].reshape(1, -1).astype(jnp.float32)))
    return {"cols": cols, "num_sparse": len(params["sparse"])}


# ----------------------------- forward ---------------------------------------

def multi_embed_transform(prepared, sparse_col_inp=(), dense_col_inp=(), aggregation="concat"):
    cols = prepared["cols"]
    idx_list = list(sparse_col_inp) + list(dense_col_inp)
    assert len(idx_list) == len(cols)
    num_cols = len(cols)
    b = idx_list[0].shape[0]

    tb = b if b <= 128 else 128                 # batch tile (lane/sublane friendly)
    assert b % tb == 0 and (tb == b or tb % 8 == 0)

    out_dims = [p["w2"].shape[1] for p in cols]
    kernel_agg = "concat" if aggregation is None else aggregation
    if kernel_agg == "concat":
        out_width = sum(out_dims)
    else:
        assert len(set(out_dims)) == 1
        out_width = out_dims[0]

    inputs, in_specs = [], []
    for idx, p in zip(idx_list, cols):
        v, h = p["w1f"].shape
        o = p["w2"].shape[1]
        inputs += [idx.reshape(b, 1).astype(jnp.int32), p["w1f"], p["b1"], p["w2"], p["b2"]]
        in_specs += [
            pl.BlockSpec((tb, 1), lambda t: (t, 0)),      # indices: tiled over batch
            pl.BlockSpec((v, h), lambda t: (0, 0)),       # weights: VMEM-resident across tiles
            pl.BlockSpec((1, h), lambda t: (0, 0)),
            pl.BlockSpec((h, o), lambda t: (0, 0)),
            pl.BlockSpec((1, o), lambda t: (0, 0)),
        ]

    kernel = functools.partial(_fused_kernel, num_cols=num_cols, aggregation=kernel_agg)
    out = pl.pallas_call(
        kernel,
        out_shape=jax.ShapeDtypeStruct((b, out_width), jnp.float32),
        grid=(b // tb,),
        in_specs=in_specs,
        out_specs=pl.BlockSpec((tb, out_width), lambda t: (t, 0)),   # lane-dense concat output
        compiler_params=pltpu.CompilerParams(dimension_semantics=("parallel",)),
    )(*inputs)

    if aggregation is None:
        offs = [0]
        for d in out_dims:
            offs.append(offs[-1] + d)
        per_col = [out[:, offs[i]:offs[i + 1]] for i in range(num_cols)]
        ns = prepared["num_sparse"]
        return per_col[:ns], per_col[ns:]
    return out


# ----------------------------- references ------------------------------------

def _ref_prepared(prepared, idx_list, aggregation):
    """Pure-JAX reference using the same prepared (folded, bf16) operands as the kernel."""
    outs = []
    for idx, p in zip(idx_list, prepared["cols"]):
        h = jnp.take(p["w1f"], idx, axis=0).astype(jnp.float32) + p["b1"]
        h = jnp.maximum(h, 0.0)
        o = jnp.dot(h.astype(p["w2"].dtype), p["w2"],
                    preferred_element_type=jnp.float32) + p["b2"]
        outs.append(o)
    if aggregation == "concat":
        return jnp.concatenate(outs, axis=1)
    if aggregation == "sum":
        return functools.reduce(jnp.add, outs)
    if aggregation == "mean":
        return functools.reduce(jnp.add, outs) / float(len(outs))
    if aggregation == "max":
        return functools.reduce(jnp.maximum, outs)
    raise ValueError(aggregation)


def _ref_module_f32(params, sparse_inp, dense_inp):
    """Module-semantics reference (f32, unfused: embedding lookup then dense block)."""
    outs = []
    for idx, p in zip(sparse_inp, params["sparse"]):
        emb = jax.nn.one_hot(idx, p["w1"].shape[0], dtype=jnp.float32)   # one-hot nn.Embedding
        h = jnp.maximum(emb @ p["w1"] + p["b1"], 0.0)
        outs.append(h @ p["w2"] + p["b2"])
    for idx, p in zip(dense_inp, params["dense"]):
        emb = p["table"][idx]                                            # distributional nn.Embedding
        h = jnp.maximum(emb @ p["w1"] + p["b1"], 0.0)
        outs.append(h @ p["w2"] + p["b2"])
    return jnp.concatenate(outs, axis=1)


if __name__ == "__main__":
    B = 8
    HIDDEN = 32
    OUTPUT = 32
    sparse_emb_cols = [{"emb_size": 16}, {"emb_size": 32}]
    dense_emb_cols = [{"emb_size": 64, "emb_dim": 16}]

    key = jax.random.PRNGKey(0)
    kparam, ks0, ks1, kd0 = jax.random.split(key, 4)
    params = init_multi_embed_transform(kparam, sparse_emb_cols, dense_emb_cols, HIDDEN, OUTPUT)
    prepared = prepare_multi_embed_transform(params)   # fold tables + bf16 cast, done once

    sparse_col_inp = [
        jax.random.randint(ks0, (B,), 0, sparse_emb_cols[0]["emb_size"], jnp.int32),
        jax.random.randint(ks1, (B,), 0, sparse_emb_cols[1]["emb_size"], jnp.int32),
    ]
    dense_col_inp = [
        jax.random.randint(kd0, (B,), 0, dense_emb_cols[0]["emb_size"], jnp.int32),
    ]

    # concat aggregation (module default)
    out = multi_embed_transform(prepared, sparse_col_inp, dense_col_inp, aggregation="concat")
    out = jax.block_until_ready(out)
    assert out.shape == (B, OUTPUT * 3), out.shape

    ref = _ref_prepared(prepared, sparse_col_inp + dense_col_inp, "concat")
    assert jnp.allclose(out, ref, atol=1e-4, rtol=1e-4), "mismatch vs prepared-operand reference"

    ref_f32 = _ref_module_f32(params, sparse_col_inp, dense_col_inp)
    assert jnp.allclose(out, ref_f32, atol=5e-2, rtol=5e-2), "mismatch vs module-semantics f32 reference"

    # sum aggregation (exercises the reduced-width output path)
    out_sum = multi_embed_transform(prepared, sparse_col_inp, dense_col_inp, aggregation="sum")
    out_sum = jax.block_until_ready(out_sum)
    ref_sum = _ref_prepared(prepared, sparse_col_inp + dense_col_inp, "sum")
    assert out_sum.shape == (B, OUTPUT)
    assert jnp.allclose(out_sum, ref_sum, atol=1e-4, rtol=1e-4), "mismatch (sum aggregation)"

    print("KERNEL_OK")
</pallas_src>

<mosaic_0001>
module attributes {stable_mosaic.version = 11 : i64} {
  func.func @_fused_kernel(%arg0: i32, %arg1: memref<8x1xi32, #tpu.memory_space<vmem>>, %arg2: memref<16x32xbf16, #tpu.memory_space<vmem>>, %arg3: memref<1x32xf32, #tpu.memory_space<vmem>>, %arg4: memref<32x32xbf16, #tpu.memory_space<vmem>>, %arg5: memref<1x32xf32, #tpu.memory_space<vmem>>, %arg6: memref<8x1xi32, #tpu.memory_space<vmem>>, %arg7: memref<32x32xbf16, #tpu.memory_space<vmem>>, %arg8: memref<1x32xf32, #tpu.memory_space<vmem>>, %arg9: memref<32x32xbf16, #tpu.memory_space<vmem>>, %arg10: memref<1x32xf32, #tpu.memory_space<vmem>>, %arg11: memref<8x1xi32, #tpu.memory_space<vmem>>, %arg12: memref<64x32xbf16, #tpu.memory_space<vmem>>, %arg13: memref<1x32xf32, #tpu.memory_space<vmem>>, %arg14: memref<32x32xbf16, #tpu.memory_space<vmem>>, %arg15: memref<1x32xf32, #tpu.memory_space<vmem>>, %arg16: memref<8x96xf32, #tpu.memory_space<vmem>>) attributes {dimension_semantics = [#tpu.dimension_semantics<parallel>], iteration_bounds = array<i64: 1>, scalar_prefetch = 0 : i64, scratch_operands = 0 : i64, tpu.core_type = #tpu.core_type<tc>, window_params = [{transform_indices = @transform_0, window_bounds = array<i64: 8, 1>}, {pipeline_mode = #tpu.pipeline_mode<synchronous>, transform_indices = @transform_1, window_bounds = array<i64: 16, 32>}, {pipeline_mode = #tpu.pipeline_mode<synchronous>, transform_indices = @transform_2, window_bounds = array<i64: 1, 32>}, {pipeline_mode = #tpu.pipeline_mode<synchronous>, transform_indices = @transform_3, window_bounds = array<i64: 32, 32>}, {pipeline_mode = #tpu.pipeline_mode<synchronous>, transform_indices = @transform_4, window_bounds = array<i64: 1, 32>}, {transform_indices = @transform_5, window_bounds = array<i64: 8, 1>}, {pipeline_mode = #tpu.pipeline_mode<synchronous>, transform_indices = @transform_6, window_bounds = array<i64: 32, 32>}, {pipeline_mode = #tpu.pipeline_mode<synchronous>, transform_indices = @transform_7, window_bounds = array<i64: 1, 32>}, {pipeline_mode = #tpu.pipeline_mode<synchronous>, transform_indices = @transform_8, window_bounds = array<i64: 32, 32>}, {pipeline_mode = #tpu.pipeline_mode<synchronous>, transform_indices = @transform_9, window_bounds = array<i64: 1, 32>}, {transform_indices = @transform_10, window_bounds = array<i64: 8, 1>}, {pipeline_mode = #tpu.pipeline_mode<synchronous>, transform_indices = @transform_11, window_bounds = array<i64: 64, 32>}, {pipeline_mode = #tpu.pipeline_mode<synchronous>, transform_indices = @transform_12, window_bounds = array<i64: 1, 32>}, {pipeline_mode = #tpu.pipeline_mode<synchronous>, transform_indices = @transform_13, window_bounds = array<i64: 32, 32>}, {pipeline_mode = #tpu.pipeline_mode<synchronous>, transform_indices = @transform_14, window_bounds = array<i64: 1, 32>}, {transform_indices = @transform_15, window_bounds = array<i64: 8, 96>}]} {
    %c0 = arith.constant 0 : index
    %c0_0 = arith.constant 0 : index
    %0 = vector.load %arg1[%c0, %c0_0] : memref<8x1xi32, #tpu.memory_space<vmem>>, vector<8x1xi32>
    %1 = tpu.iota {dimensions = array<i32: 1>} : vector<8x16xi32>
    %2 = vector.broadcast %0 : vector<8x1xi32> to vector<8x16xi32>
    %3 = arith.cmpi eq, %1, %2 : vector<8x16xi32>
    %4 = arith.extui %3 : vector<8x16xi1> to vector<8x16xi32>
    %5 = arith.sitofp %4 : vector<8x16xi32> to vector<8x16xf32>
    %6 = arith.truncf %5 : vector<8x16xf32> to vector<8x16xbf16>
    %c0_1 = arith.constant 0 : index
    %c0_2 = arith.constant 0 : index
    %7 = vector.load %arg2[%c0_1, %c0_2] : memref<16x32xbf16, #tpu.memory_space<vmem>>, vector<16x32xbf16>
    %cst = arith.constant dense<0.000000e+00> : vector<8x32xf32>
    %8 = tpu.matmul %6, %7, %cst {dimension_numbers = #tpu.dot_dimension_numbers<[1], [0], [0], [1], [0, 0, 1, 1], [], []>} : vector<8x16xbf16>, vector<16x32xbf16>, vector<8x32xf32> -> vector<8x32xf32>
    %c0_3 = arith.constant 0 : index
    %c0_4 = arith.constant 0 : index
    %9 = vector.load %arg3[%c0_3, %c0_4] : memref<1x32xf32, #tpu.memory_space<vmem>>, vector<1x32xf32>
    %10 = vector.broadcast %9 : vector<1x32xf32> to vector<8x32xf32>
    %11 = arith.addf %8, %10 : vector<8x32xf32>
    %cst_5 = arith.constant 0.000000e+00 : f32
    %12 = vector.broadcast %cst_5 : f32 to vector<8x32xf32>
    %13 = arith.maximumf %11, %12 : vector<8x32xf32>
    %14 = arith.truncf %13 : vector<8x32xf32> to vector<8x32xbf16>
    %c0_6 = arith.constant 0 : index
    %c0_7 = arith.constant 0 : index
    %15 = vector.load %arg4[%c0_6, %c0_7] : memref<32x32xbf16, #tpu.memory_space<vmem>>, vector<32x32xbf16>
    %cst_8 = arith.constant dense<0.000000e+00> : vector<8x32xf32>
    %16 = tpu.matmul %14, %15, %cst_8 {dimension_numbers = #tpu.dot_dimension_numbers<[1], [0], [0], [1], [0, 0, 1, 1], [], []>} : vector<8x32xbf16>, vector<32x32xbf16>, vector<8x32xf32> -> vector<8x32xf32>
    %c0_9 = arith.constant 0 : index
    %c0_10 = arith.constant 0 : index
    %17 = vector.load %arg5[%c0_9, %c0_10] : memref<1x32xf32, #tpu.memory_space<vmem>>, vector<1x32xf32>
    %18 = vector.broadcast %17 : vector<1x32xf32> to vector<8x32xf32>
    %19 = arith.addf %16, %18 : vector<8x32xf32>
    %c0_11 = arith.constant 0 : index
    %c0_12 = arith.constant 0 : index
    %20 = vector.load %arg6[%c0_11, %c0_12] : memref<8x1xi32, #tpu.memory_space<vmem>>, vector<8x1xi32>
    %21 = tpu.iota {dimensions = array<i32: 1>} : vector<8x32xi32>
    %22 = vector.broadcast %20 : vector<8x1xi32> to vector<8x32xi32>
    %23 = arith.cmpi eq, %21, %22 : vector<8x32xi32>
    %24 = arith.extui %23 : vector<8x32xi1> to vector<8x32xi32>
    %25 = arith.sitofp %24 : vector<8x32xi32> to vector<8x32xf32>
    %26 = arith.truncf %25 : vector<8x32xf32> to vector<8x32xbf16>
    %c0_13 = arith.constant 0 : index
    %c0_14 = arith.constant 0 : index
    %27 = vector.load %arg7[%c0_13, %c0_14] : memref<32x32xbf16, #tpu.memory_space<vmem>>, vector<32x32xbf16>
    %cst_15 = arith.constant dense<0.000000e+00> : vector<8x32xf32>
    %28 = tpu.matmul %26, %27, %cst_15 {dimension_numbers = #tpu.dot_dimension_numbers<[1], [0], [0], [1], [0, 0, 1, 1], [], []>} : vector<8x32xbf16>, vector<32x32xbf16>, vector<8x32xf32> -> vector<8x32xf32>
    %c0_16 = arith.constant 0 : index
    %c0_17 = arith.constant 0 : index
    %29 = vector.load %arg8[%c0_16, %c0_17] : memref<1x32xf32, #tpu.memory_space<vmem>>, vector<1x32xf32>
    %30 = vector.broadcast %29 : vector<1x32xf32> to vector<8x32xf32>
    %31 = arith.addf %28, %30 : vector<8x32xf32>
    %cst_18 = arith.constant 0.000000e+00 : f32
    %32 = vector.broadcast %cst_18 : f32 to vector<8x32xf32>
    %33 = arith.maximumf %31, %32 : vector<8x32xf32>
    %34 = arith.truncf %33 : vector<8x32xf32> to vector<8x32xbf16>
    %c0_19 = arith.constant 0 : index
    %c0_20 = arith.constant 0 : index
    %35 = vector.load %arg9[%c0_19, %c0_20] : memref<32x32xbf16, #tpu.memory_space<vmem>>, vector<32x32xbf16>
    %cst_21 = arith.constant dense<0.000000e+00> : vector<8x32xf32>
    %36 = tpu.matmul %34, %35, %cst_21 {dimension_numbers = #tpu.dot_dimension_numbers<[1], [0], [0], [1], [0, 0, 1, 1], [], []>} : vector<8x32xbf16>, vector<32x32xbf16>, vector<8x32xf32> -> vector<8x32xf32>
    %c0_22 = arith.constant 0 : index
    %c0_23 = arith.constant 0 : index
    %37 = vector.load %arg10[%c0_22, %c0_23] : memref<1x32xf32, #tpu.memory_space<vmem>>, vector<1x32xf32>
    %38 = vector.broadcast %37 : vector<1x32xf32> to vector<8x32xf32>
    %39 = arith.addf %36, %38 : vector<8x32xf32>
    %c0_24 = arith.constant 0 : index
    %c0_25 = arith.constant 0 : index
    %40 = vector.load %arg11[%c0_24, %c0_25] : memref<8x1xi32, #tpu.memory_space<vmem>>, vector<8x1xi32>
    %41 = tpu.iota {dimensions = array<i32: 1>} : vector<8x64xi32>
    %42 = vector.broadcast %40 : vector<8x1xi32> to vector<8x64xi32>
    %43 = arith.cmpi eq, %41, %42 : vector<8x64xi32>
    %44 = arith.extui %43 : vector<8x64xi1> to vector<8x64xi32>
    %45 = arith.sitofp %44 : vector<8x64xi32> to vector<8x64xf32>
    %46 = arith.truncf %45 : vector<8x64xf32> to vector<8x64xbf16>
    %c0_26 = arith.constant 0 : index
    %c0_27 = arith.constant 0 : index
    %47 = vector.load %arg12[%c0_26, %c0_27] : memref<64x32xbf16, #tpu.memory_space<vmem>>, vector<64x32xbf16>
    %cst_28 = arith.constant dense<0.000000e+00> : vector<8x32xf32>
    %48 = tpu.matmul %46, %47, %cst_28 {dimension_numbers = #tpu.dot_dimension_numbers<[1], [0], [0], [1], [0, 0, 1, 1], [], []>} : vector<8x64xbf16>, vector<64x32xbf16>, vector<8x32xf32> -> vector<8x32xf32>
    %c0_29 = arith.constant 0 : index
    %c0_30 = arith.constant 0 : index
    %49 = vector.load %arg13[%c0_29, %c0_30] : memref<1x32xf32, #tpu.memory_space<vmem>>, vector<1x32xf32>
    %50 = vector.broadcast %49 : vector<1x32xf32> to vector<8x32xf32>
    %51 = arith.addf %48, %50 : vector<8x32xf32>
    %cst_31 = arith.constant 0.000000e+00 : f32
    %52 = vector.broadcast %cst_31 : f32 to vector<8x32xf32>
    %53 = arith.maximumf %51, %52 : vector<8x32xf32>
    %54 = arith.truncf %53 : vector<8x32xf32> to vector<8x32xbf16>
    %c0_32 = arith.constant 0 : index
    %c0_33 = arith.constant 0 : index
    %55 = vector.load %arg14[%c0_32, %c0_33] : memref<32x32xbf16, #tpu.memory_space<vmem>>, vector<32x32xbf16>
    %cst_34 = arith.constant dense<0.000000e+00> : vector<8x32xf32>
    %56 = tpu.matmul %54, %55, %cst_34 {dimension_numbers = #tpu.dot_dimension_numbers<[1], [0], [0], [1], [0, 0, 1, 1], [], []>} : vector<8x32xbf16>, vector<32x32xbf16>, vector<8x32xf32> -> vector<8x32xf32>
    %c0_35 = arith.constant 0 : index
    %c0_36 = arith.constant 0 : index
    %57 = vector.load %arg15[%c0_35, %c0_36] : memref<1x32xf32, #tpu.memory_space<vmem>>, vector<1x32xf32>
    %58 = vector.broadcast %57 : vector<1x32xf32> to vector<8x32xf32>
    %59 = arith.addf %56, %58 : vector<8x32xf32>
    %60 = tpu.concatenate %19, %39, %59 in 1 : vector<8x32xf32>, vector<8x32xf32>, vector<8x32xf32> -> vector<8x96xf32>
    %c0_37 = arith.constant 0 : index
    %c0_38 = arith.constant 0 : index
    %61 = vector.load %arg16[%c0_37, %c0_38] : memref<8x96xf32, #tpu.memory_space<vmem>>, vector<8x96xf32>
    tpu.vector_store %arg16[%c0_37, %c0_38], %60 {strides = array<i32>} : memref<8x96xf32, #tpu.memory_space<vmem>>, vector<8x96xf32>,
    return
  }
  func.func @transform_0(%arg0: i32) -> (i32, i32) {
    %c0_i32 = arith.constant 0 : i32
    %c0_i32_0 = arith.constant 0 : i32
    return %arg0, %c0_i32 : i32, i32
  }
  func.func @transform_1(%arg0: i32) -> (i32, i32) {
    %c0_i32 = arith.constant 0 : i32
    %c0_i32_0 = arith.constant 0 : i32
    %c0_i32_1 = arith.constant 0 : i32
    return %c0_i32, %c0_i32_0 : i32, i32
  }
  func.func @transform_2(%arg0: i32) -> (i32, i32) {
    %c0_i32 = arith.constant 0 : i32
    %c0_i32_0 = arith.constant 0 : i32
    %c0_i32_1 = arith.constant 0 : i32
    return %c0_i32, %c0_i32_0 : i32, i32
  }
  func.func @transform_3(%arg0: i32) -> (i32, i32) {
    %c0_i32 = arith.constant 0 : i32
    %c0_i32_0 = arith.constant 0 : i32
    %c0_i32_1 = arith.constant 0 : i32
    return %c0_i32, %c0_i32_0 : i32, i32
  }
  func.func @transform_4(%arg0: i32) -> (i32, i32) {
    %c0_i32 = arith.constant 0 : i32
    %c0_i32_0 = arith.constant 0 : i32
    %c0_i32_1 = arith.constant 0 : i32
    return %c0_i32, %c0_i32_0 : i32, i32
  }
  func.func @transform_5(%arg0: i32) -> (i32, i32) {
    %c0_i32 = arith.constant 0 : i32
    %c0_i32_0 = arith.constant 0 : i32
    return %arg0, %c0_i32 : i32, i32
  }
  func.func @transform_6(%arg0: i32) -> (i32, i32) {
    %c0_i32 = arith.constant 0 : i32
    %c0_i32_0 = arith.constant 0 : i32
    %c0_i32_1 = arith.constant 0 : i32
    return %c0_i32, %c0_i32_0 : i32, i32
  }
  func.func @transform_7(%arg0: i32) -> (i32, i32) {
    %c0_i32 = arith.constant 0 : i32
    %c0_i32_0 = arith.constant 0 : i32
    %c0_i32_1 = arith.constant 0 : i32
    return %c0_i32, %c0_i32_0 : i32, i32
  }
  func.func @transform_8(%arg0: i32) -> (i32, i32) {
    %c0_i32 = arith.constant 0 : i32
    %c0_i32_0 = arith.constant 0 : i32
    %c0_i32_1 = arith.constant 0 : i32
    return %c0_i32, %c0_i32_0 : i32, i32
  }
  func.func @transform_9(%arg0: i32) -> (i32, i32) {
    %c0_i32 = arith.constant 0 : i32
    %c0_i32_0 = arith.constant 0 : i32
    %c0_i32_1 = arith.constant 0 : i32
    return %c0_i32, %c0_i32_0 : i32, i32
  }
  func.func @transform_10(%arg0: i32) -> (i32, i32) {
    %c0_i32 = arith.constant 0 : i32
    %c0_i32_0 = arith.constant 0 : i32
    return %arg0, %c0_i32 : i32, i32
  }
  func.func @transform_11(%arg0: i32) -> (i32, i32) {
    %c0_i32 = arith.constant 0 : i32
    %c0_i32_0 = arith.constant 0 : i32
    %c0_i32_1 = arith.constant 0 : i32
    return %c0_i32, %c0_i32_0 : i32, i32
  }
  func.func @transform_12(%arg0: i32) -> (i32, i32) {
    %c0_i32 = arith.constant 0 : i32
    %c0_i32_0 = arith.constant 0 : i32
    %c0_i32_1 = arith.constant 0 : i32
    return %c0_i32, %c0_i32_0 : i32, i32
  }
  func.func @transform_13(%arg0: i32) -> (i32, i32) {
    %c0_i32 = arith.constant 0 : i32
    %c0_i32_0 = arith.constant 0 : i32
    %c0_i32_1 = arith.constant 0 : i32
    return %c0_i32, %c0_i32_0 : i32, i32
  }
  func.func @transform_14(%arg0: i32) -> (i32, i32) {
    %c0_i32 = arith.constant 0 : i32
    %c0_i32_0 = arith.constant 0 : i32
    %c0_i32_1 = arith.constant 0 : i32
    return %c0_i32, %c0_i32_0 : i32, i32
  }
  func.func @transform_15(%arg0: i32) -> (i32, i32) {
    %c0_i32 = arith.constant 0 : i32
    %c0_i32_0 = arith.constant 0 : i32
    return %arg0, %c0_i32 : i32, i32
  }
}

</mosaic_0001>

<llo_original>
// kernel: tpu_custom_call.1
$region0: #{tpu_custom_call.1}
  #allocation0 [shape = 'u32[]', space=smem, size = 0x4, offset = 0x4, fixed_abs, tag = 'smem constant byte address 0x4 - core index']
  #allocation1 [shape = 'u32[144,128]{1,0:T(1,128)}', space=vmem, size = 0x12000, scoped, tag = 'internal scratch']
  %s0 = inlined_call_operand.vmem [shape: s32[8,1], index: 0, kind: input, shape index: {}]
  %s1 = inlined_call_operand.hbm [shape: bf16[16,32], index: 1, kind: input, shape index: {}]
  %s2 = inlined_call_operand.vmem [shape: f32[1,32], index: 2, kind: input, shape index: {}]
  %s3 = inlined_call_operand.vmem [shape: bf16[32,32], index: 3, kind: input, shape index: {}]
  %s4 = inlined_call_operand.vmem [shape: f32[1,32], index: 4, kind: input, shape index: {}]
  %s5 = inlined_call_operand.vmem [shape: s32[8,1], index: 5, kind: input, shape index: {}]
  %s6 = inlined_call_operand.vmem [shape: bf16[32,32], index: 6, kind: input, shape index: {}]
  %s7 = inlined_call_operand.vmem [shape: f32[1,32], index: 7, kind: input, shape index: {}]
  %s8 = inlined_call_operand.vmem [shape: bf16[32,32], index: 8, kind: input, shape index: {}]
  %s9 = inlined_call_operand.vmem [shape: f32[1,32], index: 9, kind: input, shape index: {}]
  %s10 = inlined_call_operand.vmem [shape: s32[8,1], index: 10, kind: input, shape index: {}]
  %s11 = inlined_call_operand.vmem [shape: bf16[64,32], index: 11, kind: input, shape index: {}]
  %s12 = inlined_call_operand.vmem [shape: f32[1,32], index: 12, kind: input, shape index: {}]
  %s13 = inlined_call_operand.vmem [shape: bf16[32,32], index: 13, kind: input, shape index: {}]
  %s14 = inlined_call_operand.vmem [shape: f32[1,32], index: 14, kind: input, shape index: {}]
  %s15 = inlined_call_operand.hbm [shape: f32[8,96], index: 15, kind: output, shape index: {}]
  %s16 = sld [smem:[#allocation0]]
  $region74: #{tpu_custom_call.1} parent=0
    _
  %s18 = ssub.s32 1, %s16
  %s19 = scalar_select 0, %s18, %s16
  $region1: #{tpu_custom_call.1} parent=0
    #allocation2 [shape = 'u8[4096]{0}', space=vmem, size = 0x1000, scoped, tag = 'input window, operand 1, single buffered']
    #allocation3 [shape = 's32[1]{0}', space=sflag, size = 0x4, scoped, tag = 'scoped memory for tpu_custom_call.1']
    #allocation4 [shape = 's32[1]{0}', space=sflag, size = 0x4, scoped, tag = 'scoped memory for tpu_custom_call.1']
    #allocation5 [shape = 'u8[4096]{0}', space=vmem, size = 0x1000, scoped, tag = 'output window, operand 0, single buffered']
    %20 = vsyncpa [#allocation3], 0
    %21 = vsyncpa [#allocation4], 0
    // Predicated region
    $region2: #{tpu_custom_call.1} parent=1 // pred_check
      _
    $region3: #{tpu_custom_call.1} parent=1 // pred_check_branch
      %23 = sbr.rel (0) target = $region5
    $region4: #{tpu_custom_call.1} parent=1 // pred_region
      _
    $region5: #{tpu_custom_call.1} parent=1 // pred_fallthru
      _
    // Predicated region
    $region6: #{tpu_custom_call.1} parent=1 // pred_check
      _
    $region7: #{tpu_custom_call.1} parent=1 // pred_check_branch
      %25 = sbr.rel (0) target = $region9
    $region8: #{tpu_custom_call.1} parent=1 // pred_region
      %s27 = ssub.s32 128, 128
      %28 = vsyncadd [#allocation3], %s27
      %s29 = sshll.u32 [#allocation2], 4
      %s30 = int_to_ptr.vmem [resolvable:$true] %s29
      %35 = dma.hbm_to_vmem [thread:$0]  %s1, 128, %s30, [#allocation3], 64, 64, 4
    $region9: #{tpu_custom_call.1} parent=1 // pred_fallthru
      _
    // Predicated region
    $region10: #{tpu_custom_call.1} parent=1 // pred_check
      _
    $region11: #{tpu_custom_call.1} parent=1 // pred_check_branch
      %37 = sbr.rel (0) target = $region13
    $region12: #{tpu_custom_call.1} parent=1 // pred_region
      _
    $region13: #{tpu_custom_call.1} parent=1 // pred_fallthru
      _
    // Predicated region
    $region14: #{tpu_custom_call.1} parent=1 // pred_check
      _
    $region15: #{tpu_custom_call.1} parent=1 // pred_check_branch
      %39 = sbr.rel (0) target = $region17
    $region16: #{tpu_custom_call.1} parent=1 // pred_region
      _
    $region17: #{tpu_custom_call.1} parent=1 // pred_fallthru
      _
    // Predicated region
    $region18: #{tpu_custom_call.1} parent=1 // pred_check
      _
    $region19: #{tpu_custom_call.1} parent=1 // pred_check_branch
      %41 = sbr.rel (0) target = $region21
    $region20: #{tpu_custom_call.1} parent=1 // pred_region
      _
    $region21: #{tpu_custom_call.1} parent=1 // pred_fallthru
      _
    // Predicated region
    $region22: #{tpu_custom_call.1} parent=1 // pred_check
      _
    $region23: #{tpu_custom_call.1} parent=1 // pred_check_branch
      %43 = sbr.rel (0) target = $region25
    $region24: #{tpu_custom_call.1} parent=1 // pred_region
      _
    $region25: #{tpu_custom_call.1} parent=1 // pred_fallthru
      _
    // Predicated region
    $region26: #{tpu_custom_call.1} parent=1 // pred_check
      _
    $region27: #{tpu_custom_call.1} parent=1 // pred_check_branch
      %45 = sbr.rel (0) target = $region29
    $region28: #{tpu_custom_call.1} parent=1 // pred_region
      _
    $region29: #{tpu_custom_call.1} parent=1 // pred_fallthru
      _
    // Predicated region
    $region30: #{tpu_custom_call.1} parent=1 // pred_check
      _
    $region31: #{tpu_custom_call.1} parent=1 // pred_check_branch
      %47 = sbr.rel (0) target = $region33
    $region32: #{tpu_custom_call.1} parent=1 // pred_region
      _
    $region33: #{tpu_custom_call.1} parent=1 // pred_fallthru
      _
    // Predicated region
    $region34: #{tpu_custom_call.1} parent=1 // pred_check
      _
    $region35: #{tpu_custom_call.1} parent=1 // pred_check_branch
      %49 = sbr.rel (0) target = $region37
    $region36: #{tpu_custom_call.1} parent=1 // pred_region
      _
    $region37: #{tpu_custom_call.1} parent=1 // pred_fallthru
      _
    // Predicated region
    $region38: #{tpu_custom_call.1} parent=1 // pred_check
      _
    $region39: #{tpu_custom_call.1} parent=1 // pred_check_branch
      %51 = sbr.rel (0) target = $region41
    $region40: #{tpu_custom_call.1} parent=1 // pred_region
      _
    $region41: #{tpu_custom_call.1} parent=1 // pred_fallthru
      _
    // Predicated region
    $region42: #{tpu_custom_call.1} parent=1 // pred_check
      _
    $region43: #{tpu_custom_call.1} parent=1 // pred_check_branch
      %53 = sbr.rel (0) target = $region45
    $region44: #{tpu_custom_call.1} parent=1 // pred_region
      _
    $region45: #{tpu_custom_call.1} parent=1 // pred_fallthru
      _
    // Predicated region
    $region46: #{tpu_custom_call.1} parent=1 // pred_check
      _
    $region47: #{tpu_custom_call.1} parent=1 // pred_check_branch
      %55 = sbr.rel (0) target = $region49
    $region48: #{tpu_custom_call.1} parent=1 // pred_region
      _
    $region49: #{tpu_custom_call.1} parent=1 // pred_fallthru
      _
    // Predicated region
    $region50: #{tpu_custom_call.1} parent=1 // pred_check
      _
    $region51: #{tpu_custom_call.1} parent=1 // pred_check_branch
      %57 = sbr.rel (0) target = $region53
    $region52: #{tpu_custom_call.1} parent=1 // pred_region
      _
    $region53: #{tpu_custom_call.1} parent=1 // pred_fallthru
      _
    // Predicated region
    $region54: #{tpu_custom_call.1} parent=1 // pred_check
      _
    $region55: #{tpu_custom_call.1} parent=1 // pred_check_branch
      %59 = sbr.rel (0) target = $region57
    $region56: #{tpu_custom_call.1} parent=1 // pred_region
      _
    $region57: #{tpu_custom_call.1} parent=1 // pred_fallthru
      _
    // Predicated region
    $region58: #{tpu_custom_call.1} parent=1 // pred_check
      _
    $region59: #{tpu_custom_call.1} parent=1 // pred_check_branch
      %61 = sbr.rel (0) target = $region61
    $region60: #{tpu_custom_call.1} parent=1 // pred_region
      _
    $region61: #{tpu_custom_call.1} parent=1 // pred_fallthru
      _
    // Predicated region
    $region62: #{tpu_custom_call.1} parent=1 // pred_check
      _
    $region63: #{tpu_custom_call.1} parent=1 // pred_check_branch
      %63 = sbr.rel (0) target = $region65
    $region64: #{tpu_custom_call.1} parent=1 // pred_region
      %64 = dma.done [#allocation3], 128
    $region65: #{tpu_custom_call.1} parent=1 // pred_fallthru
      _
    %v66 = vld [vmem:[%s0] sm:$0xff]
    %v67 = vlaneseq
    %v68 = vand.u32 %v67, 127
    %69 = vset.pattern.permute.xlu0 0
    %70 = vperm.xlu0 %69, %v66
    %v71 = vpop.permute.xlu0 %70
    %vm72 = vcmp.eq.s32.totalorder %v68, %v71
    %v73 = vsel %vm72, 1, 0
    %v74 = vcvt.s32.f32 %v73
    %v75 = vpack.c.bf16 %v74, %v74
    %v76 = vld [vmem:[#allocation2] sm:$0xf]
    %v77 = vld [vmem:[#allocation2 + $0x4] sm:$0xf]
    %v78 = vld [vmem:[%s2] sm:$0x1]
    %v80 = vlaneseq
    %v81 = vshrl.u32 %v80, 7
    %v82 = vsub.s32 0, %v81
    %v83 = vrot.slane %v78, %v82
    %v87 = vunpack.c.l.b16 %v76
    %v88 = vunpack.c.l.b16 %v77
    %v89 = vpack.c.b16 %v88, %v87
    %vm91 = vcmask 130048
    %v93 = vsel %vm91, %v75, 0
    %95 = vmatprep.subr.bf16.mxu0 0
    %96 = vmatpush1.bf16.msra.mxu0 %v89
    %97 = vmatprep.subr.bf16.mxu0 0
    %98 = vmatpush1.bf16.msra.mxu0 0
    %99 = vmatprep.subr.bf16.mxu0 0
    %100 = vmatpush1.bf16.msra.mxu0 0
    %101 = vmatprep.subr.bf16.mxu0 0
    %102 = vmatpush1.bf16.msra.mxu0 0
    %103 = vmatprep.subr.bf16.mxu0 0
    %104 = vmatpush1.bf16.msra.mxu0 0
    %105 = vmatprep.subr.bf16.mxu0 0
    %106 = vmatpush1.bf16.msra.mxu0 0
    %107 = vmatprep.subr.bf16.mxu0 0
    %108 = vmatpush1.bf16.msra.mxu0 0
    %109 = vmatprep.subr.bf16.mxu0 0
    %110 = vmatpush1.bf16.msra.mxu0 0
    %111 = vmatprep.subr.bf16.mxu0 0
    %112 = vmatpush1.bf16.msra.mxu0 0
    %113 = vmatprep.subr.bf16.mxu0 0
    %114 = vmatpush1.bf16.msra.mxu0 0
    %115 = vmatprep.subr.bf16.mxu0 0
    %116 = vmatpush1.bf16.msra.mxu0 0
    %117 = vmatprep.subr.bf16.mxu0 0
    %118 = vmatpush1.bf16.msra.mxu0 0
    %119 = vmatprep.subr.bf16.mxu0 0
    %120 = vmatpush1.bf16.msra.mxu0 0
    %121 = vmatprep.subr.bf16.mxu0 0
    %122 = vmatpush1.bf16.msra.mxu0 0
    %123 = vmatprep.subr.bf16.mxu0 0
    %124 = vmatpush1.bf16.msra.mxu0 0
    %125 = vmatprep.subr.bf16.mxu0 0
    %126 = vmatpush1.bf16.msra.mxu0 0
    %127 = vmatprep.mubr.bf16.mxu0 0
    %128 = vmatmul.mubr.bf16.gmra.mrb[0].mxu0 %v93
    %v129 = vpop.f32.mrb[0].mxu0
    %v130 = vadd.f32 %v83, %v129
    %v131 = vpop.f32.mrb[0].mxu0
    %v132 = vpop.f32.mrb[0].mxu0
    %v133 = vpop.f32.mrb[0].mxu0
    %134 = vdwg.mxu0
    %v135 = vmax.f32 %v130, 0.0
    %v136 = vpack.c.bf16 %v135, %v135
    %v137 = vld [vmem:[%s3] sm:$0xf]
    %v138 = vld [vmem:[%s3 + $0x4] sm:$0xf]
    %v139 = vld [vmem:[%s3 + $0x8] sm:$0xf]
    %v140 = vld [vmem:[%s3 + $0xc] sm:$0xf]
    %v141 = vld [vmem:[%s4] sm:$0x1]
    %v143 = vlaneseq
    %v144 = vshrl.u32 %v143, 7
    %v145 = vsub.s32 0, %v144
    %v146 = vrot.slane %v141, %v145
    %v152 = vunpack.c.l.b16 %v137
    %v153 = vunpack.c.l.b16 %v138
    %v154 = vunpack.c.l.b16 %v139
    %v155 = vunpack.c.l.b16 %v140
    %v156 = vpack.c.b16 %v153, %v152
    %v157 = vpack.c.b16 %v155, %v154
    %vm160 = vcmask 261120
    %v162 = vsel %vm160, %v136, 0
    %164 = vmatprep.subr.bf16.mxu0 0
    %165 = vmatpush1.bf16.msra.mxu0 %v156
    %166 = vmatprep.subr.bf16.mxu0 0
    %167 = vmatpush1.bf16.msra.mxu0 %v157
    %168 = vmatprep.subr.bf16.mxu0 0
    %169 = vmatpush1.bf16.msra.mxu0 0
    %170 = vmatprep.subr.bf16.mxu0 0
    %171 = vmatpush1.bf16.msra.mxu0 0
    %172 = vmatprep.subr.bf16.mxu0 0
    %173 = vmatpush1.bf16.msra.mxu0 0
    %174 = vmatprep.subr.bf16.mxu0 0
    %175 = vmatpush1.bf16.msra.mxu0 0
    %176 = vmatprep.subr.bf16.mxu0 0
    %177 = vmatpush1.bf16.msra.mxu0 0
    %178 = vmatprep.subr.bf16.mxu0 0
    %179 = vmatpush1.bf16.msra.mxu0 0
    %180 = vmatprep.subr.bf16.mxu0 0
    %181 = vmatpush1.bf16.msra.mxu0 0
    %182 = vmatprep.subr.bf16.mxu0 0
    %183 = vmatpush1.bf16.msra.mxu0 0
    %184 = vmatprep.subr.bf16.mxu0 0
    %185 = vmatpush1.bf16.msra.mxu0 0
    %186 = vmatprep.subr.bf16.mxu0 0
    %187 = vmatpush1.bf16.msra.mxu0 0
    %188 = vmatprep.subr.bf16.mxu0 0
    %189 = vmatpush1.bf16.msra.mxu0 0
    %190 = vmatprep.subr.bf16.mxu0 0
    %191 = vmatpush1.bf16.msra.mxu0 0
    %192 = vmatprep.subr.bf16.mxu0 0
    %193 = vmatpush1.bf16.msra.mxu0 0
    %194 = vmatprep.subr.bf16.mxu0 0
    %195 = vmatpush1.bf16.msra.mxu0 0
    %196 = vmatprep.mubr.bf16.mxu0 0
    %197 = vmatmul.mubr.bf16.gmra.mrb[0].mxu0 %v162
    %v198 = vpop.f32.mrb[0].mxu0
    %v199 = vadd.f32 %v146, %v198
    %v200 = vpop.f32.mrb[0].mxu0
    %v201 = vpop.f32.mrb[0].mxu0
    %v202 = vpop.f32.mrb[0].mxu0
    %203 = vdwg.mxu0
    %v204 = vld [vmem:[%s5] sm:$0xff]
    %205 = vset.pattern.permute.xlu0 0
    %206 = vperm.xlu0 %205, %v204
    %v207 = vpop.permute.xlu0 %206
    %vm208 = vcmp.eq.s32.totalorder %v68, %v207
    %v209 = vsel %vm208, 1, 0
    %v210 = vcvt.s32.f32 %v209
    %v211 = vpack.c.bf16 %v210, %v210
    %v212 = vld [vmem:[%s6] sm:$0xf]
    %v213 = vld [vmem:[%s6 + $0x4] sm:$0xf]
    %v214 = vld [vmem:[%s6 + $0x8] sm:$0xf]
    %v215 = vld [vmem:[%s6 + $0xc] sm:$0xf]
    %v216 = vld [vmem:[%s7] sm:$0x1]
    %v218 = vlaneseq
    %v219 = vshrl.u32 %v218, 7
    %v220 = vsub.s32 0, %v219
    %v221 = vrot.slane %v216, %v220
    %v227 = vunpack.c.l.b16 %v212
    %v228 = vunpack.c.l.b16 %v213
    %v229 = vunpack.c.l.b16 %v214
    %v230 = vunpack.c.l.b16 %v215
    %v231 = vpack.c.b16 %v228, %v227
    %v232 = vpack.c.b16 %v230, %v229
    %v236 = vsel %vm160, %v211, 0
    %238 = vmatprep.subr.bf16.mxu0 0
    %239 = vmatpush1.bf16.msra.mxu0 %v231
    %240 = vmatprep.subr.bf16.mxu0 0
    %241 = vmatpush1.bf16.msra.mxu0 %v232
    %242 = vmatprep.subr.bf16.mxu0 0
    %243 = vmatpush1.bf16.msra.mxu0 0
    %244 = vmatprep.subr.bf16.mxu0 0
    %245 = vmatpush1.bf16.msra.mxu0 0
    %246 = vmatprep.subr.bf16.mxu0 0
    %247 = vmatpush1.bf16.msra.mxu0 0
    %248 = vmatprep.subr.bf16.mxu0 0
    %249 = vmatpush1.bf16.msra.mxu0 0
    %250 = vmatprep.subr.bf16.mxu0 0
    %251 = vmatpush1.bf16.msra.mxu0 0
    %252 = vmatprep.subr.bf16.mxu0 0
    %253 = vmatpush1.bf16.msra.mxu0 0
    %254 = vmatprep.subr.bf16.mxu0 0
    %255 = vmatpush1.bf16.msra.mxu0 0
    %256 = vmatprep.subr.bf16.mxu0 0
    %257 = vmatpush1.bf16.msra.mxu0 0
    %258 = vmatprep.subr.bf16.mxu0 0
    %259 = vmatpush1.bf16.msra.mxu0 0
    %260 = vmatprep.subr.bf16.mxu0 0
    %261 = vmatpush1.bf16.msra.mxu0 0
    %262 = vmatprep.subr.bf16.mxu0 0
    %263 = vmatpush1.bf16.msra.mxu0 0
    %264 = vmatprep.subr.bf16.mxu0 0
    %265 = vmatpush1.bf16.msra.mxu0 0
    %266 = vmatprep.subr.bf16.mxu0 0
    %267 = vmatpush1.bf16.msra.mxu0 0
    %268 = vmatprep.subr.bf16.mxu0 0
    %269 = vmatpush1.bf16.msra.mxu0 0
    %270 = vmatprep.mubr.bf16.mxu0 0
    %271 = vmatmul.mubr.bf16.gmra.mrb[0].mxu0 %v236
    %v272 = vpop.f32.mrb[0].mxu0
    %v273 = vadd.f32 %v221, %v272
    %v274 = vpop.f32.mrb[0].mxu0
    %v275 = vpop.f32.mrb[0].mxu0
    %v276 = vpop.f32.mrb[0].mxu0
    %277 = vdwg.mxu0
    %v278 = vmax.f32 %v273, 0.0
    %v279 = vpack.c.bf16 %v278, %v278
    %v280 = vld [vmem:[%s8] sm:$0xf]
    %v281 = vld [vmem:[%s8 + $0x4] sm:$0xf]
    %v282 = vld [vmem:[%s8 + $0x8] sm:$0xf]
    %v283 = vld [vmem:[%s8 + $0xc] sm:$0xf]
    %v284 = vld [vmem:[%s9] sm:$0x1]
    %v286 = vlaneseq
    %v287 = vshrl.u32 %v286, 7
    %v288 = vsub.s32 0, %v287
    %v289 = vrot.slane %v284, %v288
    %v295 = vunpack.c.l.b16 %v280
    %v296 = vunpack.c.l.b16 %v281
    %v297 = vunpack.c.l.b16 %v282
    %v298 = vunpack.c.l.b16 %v283
    %v299 = vpack.c.b16 %v296, %v295
    %v300 = vpack.c.b16 %v298, %v297
    %v304 = vsel %vm160, %v279, 0
    %306 = vmatprep.subr.bf16.mxu0 0
    %307 = vmatpush1.bf16.msra.mxu0 %v299
    %308 = vmatprep.subr.bf16.mxu0 0
    %309 = vmatpush1.bf16.msra.mxu0 %v300
    %310 = vmatprep.subr.bf16.mxu0 0
    %311 = vmatpush1.bf16.msra.mxu0 0
    %312 = vmatprep.subr.bf16.mxu0 0
    %313 = vmatpush1.bf16.msra.mxu0 0
    %314 = vmatprep.subr.bf16.mxu0 0
    %315 = vmatpush1.bf16.msra.mxu0 0
    %316 = vmatprep.subr.bf16.mxu0 0
    %317 = vmatpush1.bf16.msra.mxu0 0
    %318 = vmatprep.subr.bf16.mxu0 0
    %319 = vmatpush1.bf16.msra.mxu0 0
    %320 = vmatprep.subr.bf16.mxu0 0
    %321 = vmatpush1.bf16.msra.mxu0 0
    %322 = vmatprep.subr.bf16.mxu0 0
    %323 = vmatpush1.bf16.msra.mxu0 0
    %324 = vmatprep.subr.bf16.mxu0 0
    %325 = vmatpush1.bf16.msra.mxu0 0
    %326 = vmatprep.subr.bf16.mxu0 0
    %327 = vmatpush1.bf16.msra.mxu0 0
    %328 = vmatprep.subr.bf16.mxu0 0
    %329 = vmatpush1.bf16.msra.mxu0 0
    %330 = vmatprep.subr.bf16.mxu0 0
    %331 = vmatpush1.bf16.msra.mxu0 0
    %332 = vmatprep.subr.bf16.mxu0 0
    %333 = vmatpush1.bf16.msra.mxu0 0
    %334 = vmatprep.subr.bf16.mxu0 0
    %335 = vmatpush1.bf16.msra.mxu0 0
    %336 = vmatprep.subr.bf16.mxu0 0
    %337 = vmatpush1.bf16.msra.mxu0 0
    %338 = vmatprep.mubr.bf16.mxu0 0
    %339 = vmatmul.mubr.bf16.gmra.mrb[0].mxu0 %v304
    %v340 = vpop.f32.mrb[0].mxu0
    %v341 = vadd.f32 %v289, %v340
    %v342 = vpop.f32.mrb[0].mxu0
    %v343 = vpop.f32.mrb[0].mxu0
    %v344 = vpop.f32.mrb[0].mxu0
    %345 = vdwg.mxu0
    %v346 = vld [vmem:[%s10] sm:$0xff]
    %347 = vset.pattern.permute.xlu0 0
    %348 = vperm.xlu0 %347, %v346
    %v349 = vpop.permute.xlu0 %348
    %vm350 = vcmp.eq.s32.totalorder %v68, %v349
    %v351 = vsel %vm350, 1, 0
    %v352 = vcvt.s32.f32 %v351
    %v353 = vpack.c.bf16 %v352, %v352
    %v354 = vld [vmem:[%s11] sm:$0xf]
    %v355 = vld [vmem:[%s11 + $0x4] sm:$0xf]
    %v356 = vld [vmem:[%s11 + $0x8] sm:$0xf]
    %v357 = vld [vmem:[%s11 + $0xc] sm:$0xf]
    %v358 = vld [vmem:[%s11 + $0x10] sm:$0xf]
    %v359 = vld [vmem:[%s11 + $0x14] sm:$0xf]
    %v360 = vld [vmem:[%s11 + $0x18] sm:$0xf]
    %v361 = vld [vmem:[%s11 + $0x1c] sm:$0xf]
    %v362 = vld [vmem:[%s12] sm:$0x1]
    %v364 = vlaneseq
    %v365 = vshrl.u32 %v364, 7
    %v366 = vsub.s32 0, %v365
    %v367 = vrot.slane %v362, %v366
    %v377 = vunpack.c.l.b16 %v354
    %v378 = vunpack.c.l.b16 %v355
    %v379 = vunpack.c.l.b16 %v356
    %v380 = vunpack.c.l.b16 %v357
    %v381 = vunpack.c.l.b16 %v358
    %v382 = vunpack.c.l.b16 %v359
    %v383 = vunpack.c.l.b16 %v360
    %v384 = vunpack.c.l.b16 %v361
    %v385 = vpack.c.b16 %v378, %v377
    %v386 = vpack.c.b16 %v380, %v379
    %v387 = vpack.c.b16 %v382, %v381
    %v388 = vpack.c.b16 %v384, %v383
    %vm393 = vcmask 523264
    %v395 = vsel %vm393, %v353, 0
    %397 = vmatprep.subr.bf16.mxu0 0
    %398 = vmatpush1.bf16.msra.mxu0 %v385
    %399 = vmatprep.subr.bf16.mxu0 0
    %400 = vmatpush1.bf16.msra.mxu0 %v386
    %401 = vmatprep.subr.bf16.mxu0 0
    %402 = vmatpush1.bf16.msra.mxu0 %v387
    %403 = vmatprep.subr.bf16.mxu0 0
    %404 = vmatpush1.bf16.msra.mxu0 %v388
    %405 = vmatprep.subr.bf16.mxu0 0
    %406 = vmatpush1.bf16.msra.mxu0 0
    %407 = vmatprep.subr.bf16.mxu0 0
    %408 = vmatpush1.bf16.msra.mxu0 0
    %409 = vmatprep.subr.bf16.mxu0 0
    %410 = vmatpush1.bf16.msra.mxu0 0
    %411 = vmatprep.subr.bf16.mxu0 0
    %412 = vmatpush1.bf16.msra.mxu0 0
    %413 = vmatprep.subr.bf16.mxu0 0
    %414 = vmatpush1.bf16.msra.mxu0 0
    %415 = vmatprep.subr.bf16.mxu0 0
    %416 = vmatpush1.bf16.msra.mxu0 0
    %417 = vmatprep.subr.bf16.mxu0 0
    %418 = vmatpush1.bf16.msra.mxu0 0
    %419 = vmatprep.subr.bf16.mxu0 0
    %420 = vmatpush1.bf16.msra.mxu0 0
    %421 = vmatprep.subr.bf16.mxu0 0
    %422 = vmatpush1.bf16.msra.mxu0 0
    %423 = vmatprep.subr.bf16.mxu0 0
    %424 = vmatpush1.bf16.msra.mxu0 0
    %425 = vmatprep.subr.bf16.mxu0 0
    %426 = vmatpush1.bf16.msra.mxu0 0
    %427 = vmatprep.subr.bf16.mxu0 0
    %428 = vmatpush1.bf16.msra.mxu0 0
    %429 = vmatprep.mubr.bf16.mxu0 0
    %430 = vmatmul.mubr.bf16.gmra.mrb[0].mxu0 %v395
    %v431 = vpop.f32.mrb[0].mxu0
    %v432 = vadd.f32 %v367, %v431
    %v433 = vpop.f32.mrb[0].mxu0
    %v434 = vpop.f32.mrb[0].mxu0
    %v435 = vpop.f32.mrb[0].mxu0
    %436 = vdwg.mxu0
    %v437 = vmax.f32 %v432, 0.0
    %v438 = vpack.c.bf16 %v437, %v437
    %v439 = vld [vmem:[%s13] sm:$0xf]
    %v440 = vld [vmem:[%s13 + $0x4] sm:$0xf]
    %v441 = vld [vmem:[%s13 + $0x8] sm:$0xf]
    %v442 = vld [vmem:[%s13 + $0xc] sm:$0xf]
    %v443 = vld [vmem:[%s14] sm:$0x1]
    %v445 = vlaneseq
    %v446 = vshrl.u32 %v445, 7
    %v447 = vsub.s32 0, %v446
    %v448 = vrot.slane %v443, %v447
    %v454 = vunpack.c.l.b16 %v439
    %v455 = vunpack.c.l.b16 %v440
    %v456 = vunpack.c.l.b16 %v441
    %v457 = vunpack.c.l.b16 %v442
    %v458 = vpack.c.b16 %v455, %v454
    %v459 = vpack.c.b16 %v457, %v456
    %v463 = vsel %vm160, %v438, 0
    %465 = vmatprep.subr.bf16.mxu0 0
    %466 = vmatpush1.bf16.msra.mxu0 %v458
    %467 = vmatprep.subr.bf16.mxu0 0
    %468 = vmatpush1.bf16.msra.mxu0 %v459
    %469 = vmatprep.subr.bf16.mxu0 0
    %470 = vmatpush1.bf16.msra.mxu0 0
    %471 = vmatprep.subr.bf16.mxu0 0
    %472 = vmatpush1.bf16.msra.mxu0 0
    %473 = vmatprep.subr.bf16.mxu0 0
    %474 = vmatpush1.bf16.msra.mxu0 0
    %475 = vmatprep.subr.bf16.mxu0 0
    %476 = vmatpush1.bf16.msra.mxu0 0
    %477 = vmatprep.subr.bf16.mxu0 0
    %478 = vmatpush1.bf16.msra.mxu0 0
    %479 = vmatprep.subr.bf16.mxu0 0
    %480 = vmatpush1.bf16.msra.mxu0 0
    %481 = vmatprep.subr.bf16.mxu0 0
    %482 = vmatpush1.bf16.msra.mxu0 0
    %483 = vmatprep.subr.bf16.mxu0 0
    %484 = vmatpush1.bf16.msra.mxu0 0
    %485 = vmatprep.subr.bf16.mxu0 0
    %486 = vmatpush1.bf16.msra.mxu0 0
    %487 = vmatprep.subr.bf16.mxu0 0
    %488 = vmatpush1.bf16.msra.mxu0 0
    %489 = vmatprep.subr.bf16.mxu0 0
    %490 = vmatpush1.bf16.msra.mxu0 0
    %491 = vmatprep.subr.bf16.mxu0 0
    %492 = vmatpush1.bf16.msra.mxu0 0
    %493 = vmatprep.subr.bf16.mxu0 0
    %494 = vmatpush1.bf16.msra.mxu0 0
    %495 = vmatprep.subr.bf16.mxu0 0
    %496 = vmatpush1.bf16.msra.mxu0 0
    %497 = vmatprep.mubr.bf16.mxu0 0
    %498 = vmatmul.mubr.bf16.gmra.mrb[0].mxu0 %v463
    %v499 = vpop.f32.mrb[0].mxu0
    %v500 = vadd.f32 %v448, %v499
    %v501 = vpop.f32.mrb[0].mxu0
    %v502 = vpop.f32.mrb[0].mxu0
    %v503 = vpop.f32.mrb[0].mxu0
    %504 = vdwg.mxu0
    %506 = vrot.lane.b32.xlu0 %v341, 32
    %v507 = vpop.permute.xlu0 %506
    %510 = vrot.lane.b32.xlu0 %v500, 64
    %v511 = vpop.permute.xlu0 %510
    %v513 = vsel %vm160, %v199, %v507
    %v514 = vsel %vm393, %v513, %v511
    %vm515 = vcmask 785408
    %516 = vst.msk [vmem:[#allocation5] sm:$0xff] %vm515, %v514
    // Predicated region
    $region66: #{tpu_custom_call.1} parent=1 // pred_check
      _
    $region67: #{tpu_custom_call.1} parent=1 // pred_check_branch
      %518 = sbr.rel (0) target = $region69
    $region68: #{tpu_custom_call.1} parent=1 // pred_region
      %s520 = ssub.s32 128, 128
      %521 = vsyncadd [#allocation4], %s520
      %s523 = sshll.u32 [#allocation5], 4
      %s524 = int_to_ptr.vmem [resolvable:$true] %s523
      %526 = dma.vmem_to_hbm [thread:$0]  %s524, 128, %s15, [#allocation4]
    $region69: #{tpu_custom_call.1} parent=1 // pred_fallthru
      _
    // Predicated region
    $region70: #{tpu_custom_call.1} parent=1 // pred_check
      _
    $region71: #{tpu_custom_call.1} parent=1 // pred_check_branch
      %528 = sbr.rel (0) target = $region73
    $region72: #{tpu_custom_call.1} parent=1 // pred_region
      %529 = dma.done [#allocation4], 128
    $region73: #{tpu_custom_call.1} parent=1 // pred_fallthru
      _
    %530 = vsyncpa [#allocation3], 1
    %531 = vsyncpa [#allocation4], 1

</llo_original>
